<compile_context>
chip_gen: v5e
topology: v5e:2x2
jax: 0.10.0
libtpu: 0.0.40
codegen_flags: <defaults>
</compile_context>

<pallas_src>
import functools

import jax
import jax.numpy as jnp
from jax.experimental import pallas as pl
from jax.experimental.pallas import tpu as pltpu

INPUT_SIZE = 512 * 2     # 1024
HIDDEN_SIZE = 128
NEG_SLOPE = 0.01         # F.leaky_relu default
_MAX_ROW_TILE = 2048     # keeps the double-buffered f32 x tile well inside
                         # the default scoped-VMEM limit on v5e/v6e/v7x


def _leaky_relu(x):
    return jnp.where(x > 0, x, NEG_SLOPE * x)


@functools.lru_cache(maxsize=1)
def _num_tensorcores():
    """Best-effort TensorCore count (v7x = 2, v5e/v6e = 1); defaults to 1."""
    try:
        info = pltpu.get_tpu_info()
        for name in ("num_cores", "core_count", "tensor_core_count",
                     "num_tensorcores"):
            v = getattr(info, name, None)
            if v is None:
                continue
            try:
                v = int(v)
            except (TypeError, ValueError):
                continue
            if v > 0:
                return v
    except Exception:
        pass
    return 1


def mine_kernel(x_ref, w1_ref, b1_ref, w2_ref, b2_ref, o_ref):
    # x arrives as f32 straight from HBM; cast to bf16 on the VPU (huge slack)
    # right before the MXU dot, accumulate in f32.
    x_bf = x_ref[...].astype(jnp.bfloat16)
    h = jnp.dot(x_bf, w1_ref[...], preferred_element_type=jnp.float32)
    h = _leaky_relu(h + b1_ref[...])
    # fc2 has N=1: a [tm,128]@[128,1] MXU pass would use <1% of the MXU
    # columns, so do it as a VPU multiply + XLU lane reduction instead
    # (w2 is passed as a [1, hidden] row vector).
    y = jnp.sum(h * w2_ref[...], axis=-1, keepdims=True)
    y = y + b2_ref[0, 0]                       # scalar bias from SMEM
    o_ref[...] = _leaky_relu(y).astype(o_ref.dtype)
    # TODO(synk): lane-dense (1, row_tile) output (avoids masked vst on the
    # (row_tile,1) store) not applied: needs a sublane->lane relayout and the
    # absolute win is tiny since output traffic is only 4*B bytes.


def _pick_row_tile(B, tm, num_cores):
    """Largest tile on single-TC parts; >=2 steps per core on multi-TC parts
    (while keeping tiles >=128 rows); sublane(8)-aligned; no HBM padding."""
    if B < 8:
        return B                            # full-array block == full dims
    row_tile = min(max(tm, 8), B, _MAX_ROW_TILE)
    if num_cores > 1:
        per_step = pl.cdiv(B, 2 * num_cores)   # >= 2 grid steps per TC
        if per_step >= 128:                    # only split while tiles stay big
            row_tile = min(row_tile, per_step)
    return max(8, (row_tile // 8) * 8)


@functools.partial(jax.jit, static_argnames=("tm",))
def mine_forward(x, w1, b1, w2, b2, *, tm=1024):
    B, in_size = x.shape
    hidden = w1.shape[1]

    row_tile = _pick_row_tile(B, tm, _num_tensorcores())
    grid_len = pl.cdiv(B, row_tile)
    Bp = grid_len * row_tile   # only the tiny output array is padded; x is
                               # NOT padded (ragged trailing x block is masked
                               # by Pallas; garbage rows land past B and are
                               # sliced away).

    # Only the small resident operands get pre-cast/reshaped; x (dominant HBM
    # traffic) enters the kernel as-is in f32.
    w1_bf = w1.astype(jnp.bfloat16)
    b1_row = b1.reshape(1, hidden).astype(jnp.float32)
    w2_row = w2.reshape(1, hidden).astype(jnp.float32)
    b2_sc = b2.reshape(1, 1).astype(jnp.float32)

    cost = pl.CostEstimate(
        flops=2 * B * in_size * hidden + 2 * B * hidden,
        transcendentals=0,
        bytes_accessed=(B * in_size * 4          # x (f32)
                        + in_size * hidden * 2   # W1 (bf16)
                        + 2 * hidden * 4 + 4     # b1, w2, b2
                        + B * 4),                # output
    )

    out = pl.pallas_call(
        mine_kernel,
        out_shape=jax.ShapeDtypeStruct((Bp, 1), jnp.float32),
        grid=(grid_len,),
        in_specs=[
            pl.BlockSpec((row_tile, in_size), lambda i: (i, 0)),   # x tile, f32
            # Constant index_maps: W1/b1/W2 stay resident in VMEM (Pallas
            # skips re-DMA across grid steps).
            pl.BlockSpec((in_size, hidden), lambda i: (0, 0)),     # W1 (bf16)
            pl.BlockSpec((1, hidden), lambda i: (0, 0)),           # b1
            pl.BlockSpec((1, hidden), lambda i: (0, 0)),           # W2 row
            pl.BlockSpec(memory_space=pltpu.MemorySpace.SMEM),     # b2 scalar
        ],
        out_specs=pl.BlockSpec((row_tile, 1), lambda i: (i, 0)),
        compiler_params=pltpu.CompilerParams(
            dimension_semantics=("parallel",)),
        cost_estimate=cost,
    )(x, w1_bf, b1_row, w2_row, b2_sc)
    return out[:B]


def init_params(key, input_size=INPUT_SIZE, hidden_size=HIDDEN_SIZE,
                dtype=jnp.float32):
    """kaiming_normal_-style init (gain=sqrt(2), fan_in), zero biases,
    matching nn.init in Mine.__init__ (not torch's RNG stream)."""
    k1, k2 = jax.random.split(key)
    std1 = (2.0 / input_size) ** 0.5
    std2 = (2.0 / hidden_size) ** 0.5
    # stored already transposed vs torch: [in, out]
    w1 = (jax.random.normal(k1, (input_size, hidden_size)) * std1).astype(dtype)
    b1 = jnp.zeros((1, hidden_size), dtype)
    w2 = (jax.random.normal(k2, (hidden_size, 1)) * std2).astype(dtype)
    b2 = jnp.zeros((1, 1), dtype)
    return w1, b1, w2, b2


def mine_reference(x, w1, b1, w2, b2):
    h = x @ w1 + b1
    h = jnp.maximum(h, 0) + NEG_SLOPE * jnp.minimum(h, 0)
    y = h @ w2 + b2
    return jnp.maximum(y, 0) + NEG_SLOPE * jnp.minimum(y, 0)


if __name__ == "__main__":
    key = jax.random.PRNGKey(0)
    kx, kp = jax.random.split(key)
    w1, b1, w2, b2 = init_params(kp)

    # Cases: tiny full-block (B<8), aligned single block, ragged multi-block
    # (small forced tile exercises the unpadded trailing-block path), and a
    # typical aligned batch.
    for B, tm in ((4, 1024), (16, 1024), (40, 16), (256, 1024)):
        x = jax.random.normal(jax.random.fold_in(kx, B), (B, INPUT_SIZE),
                              dtype=jnp.float32)
        out = jax.block_until_ready(mine_forward(x, w1, b1, w2, b2, tm=tm))
        assert out.shape == (B, 1), out.shape

        # Tight check vs a reference seeing the same bf16-rounded x / W1.
        xr = x.astype(jnp.bfloat16).astype(jnp.float32)
        w1r = w1.astype(jnp.bfloat16).astype(jnp.float32)
        ref_bf = mine_reference(xr, w1r, b1, w2, b2)
        assert jnp.allclose(out, ref_bf, atol=2e-3, rtol=2e-3), \
            f"mismatch vs bf16-rounded reference at B={B}"

        # Loose check vs the pure-f32 PyTorch-equivalent reference (fc1
        # operands are rounded to bf16 in-kernel -> ~1e-2 relative drift).
        ref_f32 = mine_reference(x, w1, b1, w2, b2)
        assert jnp.allclose(out, ref_f32, atol=5e-2, rtol=5e-2), \
            f"mismatch vs f32 reference at B={B}"

    print("KERNEL_OK")
</pallas_src>

<mosaic_0001>
module attributes {stable_mosaic.version = 11 : i64} {
  func.func @mine_kernel(%arg0: i32, %arg1: memref<4x1024xf32, #tpu.memory_space<vmem>>, %arg2: memref<1024x128xbf16, #tpu.memory_space<vmem>>, %arg3: memref<1x128xf32, #tpu.memory_space<vmem>>, %arg4: memref<1x128xf32, #tpu.memory_space<vmem>>, %arg5: memref<1x1xf32, #tpu.memory_space<smem>>, %arg6: memref<4x1xf32, #tpu.memory_space<vmem>>) attributes {dimension_semantics = [#tpu.dimension_semantics<parallel>], iteration_bounds = array<i64: 1>, scalar_prefetch = 0 : i64, scratch_operands = 0 : i64, tpu.core_type = #tpu.core_type<tc>, window_params = [{transform_indices = @transform_0, window_bounds = array<i64: 4, 1024>}, {pipeline_mode = #tpu.pipeline_mode<synchronous>, transform_indices = @transform_1, window_bounds = array<i64: 1024, 128>}, {pipeline_mode = #tpu.pipeline_mode<synchronous>, transform_indices = @transform_2, window_bounds = array<i64: 1, 128>}, {pipeline_mode = #tpu.pipeline_mode<synchronous>, transform_indices = @transform_3, window_bounds = array<i64: 1, 128>}, {transform_indices = @transform_4, window_bounds = array<i64: 1, 1>}, {transform_indices = @transform_5, window_bounds = array<i64: 4, 1>}]} {
    %c0 = arith.constant 0 : index
    %c0_0 = arith.constant 0 : index
    %0 = vector.load %arg1[%c0, %c0_0] : memref<4x1024xf32, #tpu.memory_space<vmem>>, vector<4x1024xf32>
    %1 = arith.truncf %0 : vector<4x1024xf32> to vector<4x1024xbf16>
    %c0_1 = arith.constant 0 : index
    %c0_2 = arith.constant 0 : index
    %2 = vector.load %arg2[%c0_1, %c0_2] : memref<1024x128xbf16, #tpu.memory_space<vmem>>, vector<1024x128xbf16>
    %cst = arith.constant dense<0.000000e+00> : vector<4x128xf32>
    %3 = tpu.matmul %1, %2, %cst {dimension_numbers = #tpu.dot_dimension_numbers<[1], [0], [0], [1], [0, 0, 1, 1], [], []>} : vector<4x1024xbf16>, vector<1024x128xbf16>, vector<4x128xf32> -> vector<4x128xf32>
    %c0_3 = arith.constant 0 : index
    %c0_4 = arith.constant 0 : index
    %4 = vector.load %arg3[%c0_3, %c0_4] : memref<1x128xf32, #tpu.memory_space<vmem>>, vector<1x128xf32>
    %5 = vector.broadcast %4 : vector<1x128xf32> to vector<4x128xf32>
    %6 = arith.addf %3, %5 : vector<4x128xf32>
    %cst_5 = arith.constant 0.000000e+00 : f32
    %7 = vector.broadcast %cst_5 : f32 to vector<4x128xf32>
    %8 = arith.cmpf ogt, %6, %7 : vector<4x128xf32>
    %cst_6 = arith.constant 0.00999999977 : f32
    %9 = vector.broadcast %cst_6 : f32 to vector<4x128xf32>
    %10 = arith.mulf %9, %6 : vector<4x128xf32>
    %11 = arith.select %8, %6, %10 : vector<4x128xi1>, vector<4x128xf32>
    %c0_7 = arith.constant 0 : index
    %c0_8 = arith.constant 0 : index
    %12 = vector.load %arg4[%c0_7, %c0_8] : memref<1x128xf32, #tpu.memory_space<vmem>>, vector<1x128xf32>
    %13 = vector.broadcast %12 : vector<1x128xf32> to vector<4x128xf32>
    %14 = arith.mulf %11, %13 : vector<4x128xf32>
    %cst_9 = arith.constant dense<0.000000e+00> : vector<4xf32>
    %15 = vector.multi_reduction <add>, %14, %cst_9 [1] : vector<4x128xf32> to vector<4xf32>
    %16 = vector.shape_cast %15 : vector<4xf32> to vector<4x1xf32>
    %c0_10 = arith.constant 0 : index
    %c0_11 = arith.constant 0 : index
    %17 = memref.load %arg5[%c0_10, %c0_11] : memref<1x1xf32, #tpu.memory_space<smem>>
    %18 = vector.broadcast %17 : f32 to vector<4x1xf32>
    %19 = arith.addf %16, %18 : vector<4x1xf32>
    %cst_12 = arith.constant 0.000000e+00 : f32
    %20 = vector.broadcast %cst_12 : f32 to vector<4x1xf32>
    %21 = arith.cmpf ogt, %19, %20 : vector<4x1xf32>
    %cst_13 = arith.constant 0.00999999977 : f32
    %22 = vector.broadcast %cst_13 : f32 to vector<4x1xf32>
    %23 = arith.mulf %22, %19 : vector<4x1xf32>
    %24 = arith.select %21, %19, %23 : vector<4x1xi1>, vector<4x1xf32>
    %c0_14 = arith.constant 0 : index
    %c0_15 = arith.constant 0 : index
    %25 = vector.load %arg6[%c0_14, %c0_15] : memref<4x1xf32, #tpu.memory_space<vmem>>, vector<4x1xf32>
    tpu.vector_store %arg6[%c0_14, %c0_15], %24 {strides = array<i32>} : memref<4x1xf32, #tpu.memory_space<vmem>>, vector<4x1xf32>,
    return
  }
  func.func @transform_0(%arg0: i32) -> (i32, i32) {
    %c0_i32 = arith.constant 0 : i32
    %c0_i32_0 = arith.constant 0 : i32
    return %arg0, %c0_i32 : i32, i32
  }
  func.func @transform_1(%arg0: i32) -> (i32, i32) {
    %c0_i32 = arith.constant 0 : i32
    %c0_i32_0 = arith.constant 0 : i32
    %c0_i32_1 = arith.constant 0 : i32
    return %c0_i32, %c0_i32_0 : i32, i32
  }
  func.func @transform_2(%arg0: i32) -> (i32, i32) {
    %c0_i32 = arith.constant 0 : i32
    %c0_i32_0 = arith.constant 0 : i32
    %c0_i32_1 = arith.constant 0 : i32
    return %c0_i32, %c0_i32_0 : i32, i32
  }
  func.func @transform_3(%arg0: i32) -> (i32, i32) {
    %c0_i32 = arith.constant 0 : i32
    %c0_i32_0 = arith.constant 0 : i32
    %c0_i32_1 = arith.constant 0 : i32
    return %c0_i32, %c0_i32_0 : i32, i32
  }
  func.func @transform_4(%arg0: i32) -> (i32, i32) {
    %c0_i32 = arith.constant 0 : i32
    %c0_i32_0 = arith.constant 0 : i32
    %c0_i32_1 = arith.constant 0 : i32
    return %c0_i32, %c0_i32_0 : i32, i32
  }
  func.func @transform_5(%arg0: i32) -> (i32, i32) {
    %c0_i32 = arith.constant 0 : i32
    %c0_i32_0 = arith.constant 0 : i32
    return %arg0, %c0_i32 : i32, i32
  }
}

</mosaic_0001>

<llo_original>
// kernel: mine_forward.1
$region0: #{mine_forward.1}
  #allocation0 [shape = 'u32[]', space=smem, size = 0x4, offset = 0x4, fixed_abs, tag = 'smem constant byte address 0x4 - core index']
  #allocation1 [shape = 'u32[72,128]{1,0:T(1,128)}', space=vmem, size = 0x9000, scoped, tag = 'internal scratch']
  #allocation2 [shape = 'f32[1,1]{1,0:T(1,128)S(6)}', space=smem, size = 0x200, scoped, tag = 'scoped memory for mine_forward.1']
  %s0 = inlined_call_operand.vmem [shape: f32[4,1024], index: 0, kind: input, shape index: {}]
  %s1 = inlined_call_operand.vmem [shape: bf16[1024,128], index: 1, kind: input, shape index: {}]
  %s2 = inlined_call_operand.vmem [shape: f32[1,128], index: 2, kind: input, shape index: {}]
  %s3 = inlined_call_operand.vmem [shape: f32[1,128], index: 3, kind: input, shape index: {}]
  %s4 = inlined_call_operand.<no memory space> [shape: f32[1,1], index: 4, kind: input, shape index: {}]
  %s5 = inlined_call_operand.vmem [shape: f32[4,1], index: 5, kind: output, shape index: {}]
  %s6 = sld [smem:[#allocation0]]
  $region30: #{mine_forward.1} parent=0
    _
  %s8 = ssub.s32 1, %s6
  %s9 = scalar_select 0, %s8, %s6
  %10 = sst [smem:[#allocation2]] %s4
  // Predicated region
  $region2: #{mine_forward.1} parent=0 // pred_check
    _
  $region3: #{mine_forward.1} parent=0 // pred_check_branch
    %12 = sbr.rel (0) target = $region5
  $region4: #{mine_forward.1} parent=0 // pred_region
    _
  $region5: #{mine_forward.1} parent=0 // pred_fallthru
    _
  // Predicated region
  $region6: #{mine_forward.1} parent=0 // pred_check
    _
  $region7: #{mine_forward.1} parent=0 // pred_check_branch
    %14 = sbr.rel (0) target = $region9
  $region8: #{mine_forward.1} parent=0 // pred_region
    _
  $region9: #{mine_forward.1} parent=0 // pred_fallthru
    _
  // Predicated region
  $region10: #{mine_forward.1} parent=0 // pred_check
    _
  $region11: #{mine_forward.1} parent=0 // pred_check_branch
    %16 = sbr.rel (0) target = $region13
  $region12: #{mine_forward.1} parent=0 // pred_region
    _
  $region13: #{mine_forward.1} parent=0 // pred_fallthru
    _
  // Predicated region
  $region14: #{mine_forward.1} parent=0 // pred_check
    _
  $region15: #{mine_forward.1} parent=0 // pred_check_branch
    %18 = sbr.rel (0) target = $region17
  $region16: #{mine_forward.1} parent=0 // pred_region
    _
  $region17: #{mine_forward.1} parent=0 // pred_fallthru
    _
  // Predicated region
  $region18: #{mine_forward.1} parent=0 // pred_check
    _
  $region19: #{mine_forward.1} parent=0 // pred_check_branch
    %20 = sbr.rel (0) target = $region21
  $region20: #{mine_forward.1} parent=0 // pred_region
    _
  $region21: #{mine_forward.1} parent=0 // pred_fallthru
    _
  %v21 = vld [vmem:[%s0] sm:$0xff]
  %v22 = vld [vmem:[%s0 + $0x8] sm:$0xff]
  %v23 = vld [vmem:[%s0 + $0x10] sm:$0xff]
  %v24 = vld [vmem:[%s0 + $0x18] sm:$0xff]
  %29 = vst [vmem:[#allocation1] ss:$2 sm:$0xff] %v21
  %s30 = scalar_lea.vmem [#allocation1], 16
  %31 = vst [vmem:[%s30] ss:$2 sm:$0xff] %v22
  %s32 = scalar_lea.vmem [#allocation1], 32
  %33 = vst [vmem:[%s32] ss:$2 sm:$0xff] %v23
  %s34 = scalar_lea.vmem [#allocation1], 48
  %35 = vst [vmem:[%s34] ss:$2 sm:$0xff] %v24
  %v36 = vld.sshfl [vmem:[#allocation1] sm:$0xff pattern:$0x75316420]
  %v37 = vld.sshfl [vmem:[#allocation1 + $0x8] sm:$0xff pattern:$0x75316420]
  %v38 = vld.sshfl [vmem:[#allocation1 + $0x10] sm:$0xff pattern:$0x75316420]
  %v39 = vld.sshfl [vmem:[#allocation1 + $0x18] sm:$0xff pattern:$0x75316420]
  %v40 = vld.sshfl [vmem:[#allocation1 + $0x20] sm:$0xff pattern:$0x75316420]
  %v41 = vld.sshfl [vmem:[#allocation1 + $0x28] sm:$0xff pattern:$0x75316420]
  %v42 = vld.sshfl [vmem:[#allocation1 + $0x30] sm:$0xff pattern:$0x75316420]
  %v43 = vld.sshfl [vmem:[#allocation1 + $0x38] sm:$0xff pattern:$0x75316420]
  %v52 = vpack.c.bf16 %v36, %v36
  %v53 = vpack.c.bf16 %v37, %v37
  %v54 = vpack.c.bf16 %v38, %v38
  %v55 = vpack.c.bf16 %v39, %v39
  %v56 = vpack.c.bf16 %v40, %v40
  %v57 = vpack.c.bf16 %v41, %v41
  %v58 = vpack.c.bf16 %v42, %v42
  %v59 = vpack.c.bf16 %v43, %v43
  %v60 = vld [vmem:[%s1] sm:$0xf]
  %v61 = vld [vmem:[%s1 + $0x4] sm:$0xf]
  %v62 = vld [vmem:[%s1 + $0x8] sm:$0xf]
  %v63 = vld [vmem:[%s1 + $0xc] sm:$0xf]
  %v64 = vld [vmem:[%s1 + $0x10] sm:$0xf]
  %v65 = vld [vmem:[%s1 + $0x14] sm:$0xf]
  %v66 = vld [vmem:[%s1 + $0x18] sm:$0xf]
  %v67 = vld [vmem:[%s1 + $0x1c] sm:$0xf]
  %v68 = vld [vmem:[%s1 + $0x20] sm:$0xf]
  %v69 = vld [vmem:[%s1 + $0x24] sm:$0xf]
  %v70 = vld [vmem:[%s1 + $0x28] sm:$0xf]
  %v71 = vld [vmem:[%s1 + $0x2c] sm:$0xf]
  %v72 = vld [vmem:[%s1 + $0x30] sm:$0xf]
  %v73 = vld [vmem:[%s1 + $0x34] sm:$0xf]
  %v74 = vld [vmem:[%s1 + $0x38] sm:$0xf]
  %v75 = vld [vmem:[%s1 + $0x3c] sm:$0xf]
  %v76 = vld [vmem:[%s1 + $0x40] sm:$0xf]
  %v77 = vld [vmem:[%s1 + $0x44] sm:$0xf]
  %v78 = vld [vmem:[%s1 + $0x48] sm:$0xf]
  %v79 = vld [vmem:[%s1 + $0x4c] sm:$0xf]
  %v80 = vld [vmem:[%s1 + $0x50] sm:$0xf]
  %v81 = vld [vmem:[%s1 + $0x54] sm:$0xf]
  %v82 = vld [vmem:[%s1 + $0x58] sm:$0xf]
  %v83 = vld [vmem:[%s1 + $0x5c] sm:$0xf]
  %v84 = vld [vmem:[%s1 + $0x60] sm:$0xf]
  %v85 = vld [vmem:[%s1 + $0x64] sm:$0xf]
  %v86 = vld [vmem:[%s1 + $0x68] sm:$0xf]
  %v87 = vld [vmem:[%s1 + $0x6c] sm:$0xf]
  %v88 = vld [vmem:[%s1 + $0x70] sm:$0xf]
  %v89 = vld [vmem:[%s1 + $0x74] sm:$0xf]
  %v90 = vld [vmem:[%s1 + $0x78] sm:$0xf]
  %v91 = vld [vmem:[%s1 + $0x7c] sm:$0xf]
  %v92 = vld [vmem:[%s1 + $0x80] sm:$0xf]
  %v93 = vld [vmem:[%s1 + $0x84] sm:$0xf]
  %v94 = vld [vmem:[%s1 + $0x88] sm:$0xf]
  %v95 = vld [vmem:[%s1 + $0x8c] sm:$0xf]
  %v96 = vld [vmem:[%s1 + $0x90] sm:$0xf]
  %v97 = vld [vmem:[%s1 + $0x94] sm:$0xf]
  %v98 = vld [vmem:[%s1 + $0x98] sm:$0xf]
  %v99 = vld [vmem:[%s1 + $0x9c] sm:$0xf]
  %v100 = vld [vmem:[%s1 + $0xa0] sm:$0xf]
  %v101 = vld [vmem:[%s1 + $0xa4] sm:$0xf]
  %v102 = vld [vmem:[%s1 + $0xa8] sm:$0xf]
  %v103 = vld [vmem:[%s1 + $0xac] sm:$0xf]
  %v104 = vld [vmem:[%s1 + $0xb0] sm:$0xf]
  %v105 = vld [vmem:[%s1 + $0xb4] sm:$0xf]
  %v106 = vld [vmem:[%s1 + $0xb8] sm:$0xf]
  %v107 = vld [vmem:[%s1 + $0xbc] sm:$0xf]
  %v108 = vld [vmem:[%s1 + $0xc0] sm:$0xf]
  %v109 = vld [vmem:[%s1 + $0xc4] sm:$0xf]
  %v110 = vld [vmem:[%s1 + $0xc8] sm:$0xf]
  %v111 = vld [vmem:[%s1 + $0xcc] sm:$0xf]
  %v112 = vld [vmem:[%s1 + $0xd0] sm:$0xf]
  %v113 = vld [vmem:[%s1 + $0xd4] sm:$0xf]
  %v114 = vld [vmem:[%s1 + $0xd8] sm:$0xf]
  %v115 = vld [vmem:[%s1 + $0xdc] sm:$0xf]
  %v116 = vld [vmem:[%s1 + $0xe0] sm:$0xf]
  %v117 = vld [vmem:[%s1 + $0xe4] sm:$0xf]
  %v118 = vld [vmem:[%s1 + $0xe8] sm:$0xf]
  %v119 = vld [vmem:[%s1 + $0xec] sm:$0xf]
  %v120 = vld [vmem:[%s1 + $0xf0] sm:$0xf]
  %v121 = vld [vmem:[%s1 + $0xf4] sm:$0xf]
  %v122 = vld [vmem:[%s1 + $0xf8] sm:$0xf]
  %v123 = vld [vmem:[%s1 + $0xfc] sm:$0xf]
  %v124 = vld [vmem:[%s1 + $0x100] sm:$0xf]
  %v125 = vld [vmem:[%s1 + $0x104] sm:$0xf]
  %v126 = vld [vmem:[%s1 + $0x108] sm:$0xf]
  %v127 = vld [vmem:[%s1 + $0x10c] sm:$0xf]
  %v128 = vld [vmem:[%s1 + $0x110] sm:$0xf]
  %v129 = vld [vmem:[%s1 + $0x114] sm:$0xf]
  %v130 = vld [vmem:[%s1 + $0x118] sm:$0xf]
  %v131 = vld [vmem:[%s1 + $0x11c] sm:$0xf]
  %v132 = vld [vmem:[%s1 + $0x120] sm:$0xf]
  %v133 = vld [vmem:[%s1 + $0x124] sm:$0xf]
  %v134 = vld [vmem:[%s1 + $0x128] sm:$0xf]
  %v135 = vld [vmem:[%s1 + $0x12c] sm:$0xf]
  %v136 = vld [vmem:[%s1 + $0x130] sm:$0xf]
  %v137 = vld [vmem:[%s1 + $0x134] sm:$0xf]
  %v138 = vld [vmem:[%s1 + $0x138] sm:$0xf]
  %v139 = vld [vmem:[%s1 + $0x13c] sm:$0xf]
  %v140 = vld [vmem:[%s1 + $0x140] sm:$0xf]
  %v141 = vld [vmem:[%s1 + $0x144] sm:$0xf]
  %v142 = vld [vmem:[%s1 + $0x148] sm:$0xf]
  %v143 = vld [vmem:[%s1 + $0x14c] sm:$0xf]
  %v144 = vld [vmem:[%s1 + $0x150] sm:$0xf]
  %v145 = vld [vmem:[%s1 + $0x154] sm:$0xf]
  %v146 = vld [vmem:[%s1 + $0x158] sm:$0xf]
  %v147 = vld [vmem:[%s1 + $0x15c] sm:$0xf]
  %v148 = vld [vmem:[%s1 + $0x160] sm:$0xf]
  %v149 = vld [vmem:[%s1 + $0x164] sm:$0xf]
  %v150 = vld [vmem:[%s1 + $0x168] sm:$0xf]
  %v151 = vld [vmem:[%s1 + $0x16c] sm:$0xf]
  %v152 = vld [vmem:[%s1 + $0x170] sm:$0xf]
  %v153 = vld [vmem:[%s1 + $0x174] sm:$0xf]
  %v154 = vld [vmem:[%s1 + $0x178] sm:$0xf]
  %v155 = vld [vmem:[%s1 + $0x17c] sm:$0xf]
  %v156 = vld [vmem:[%s1 + $0x180] sm:$0xf]
  %v157 = vld [vmem:[%s1 + $0x184] sm:$0xf]
  %v158 = vld [vmem:[%s1 + $0x188] sm:$0xf]
  %v159 = vld [vmem:[%s1 + $0x18c] sm:$0xf]
  %v160 = vld [vmem:[%s1 + $0x190] sm:$0xf]
  %v161 = vld [vmem:[%s1 + $0x194] sm:$0xf]
  %v162 = vld [vmem:[%s1 + $0x198] sm:$0xf]
  %v163 = vld [vmem:[%s1 + $0x19c] sm:$0xf]
  %v164 = vld [vmem:[%s1 + $0x1a0] sm:$0xf]
  %v165 = vld [vmem:[%s1 + $0x1a4] sm:$0xf]
  %v166 = vld [vmem:[%s1 + $0x1a8] sm:$0xf]
  %v167 = vld [vmem:[%s1 + $0x1ac] sm:$0xf]
  %v168 = vld [vmem:[%s1 + $0x1b0] sm:$0xf]
  %v169 = vld [vmem:[%s1 + $0x1b4] sm:$0xf]
  %v170 = vld [vmem:[%s1 + $0x1b8] sm:$0xf]
  %v171 = vld [vmem:[%s1 + $0x1bc] sm:$0xf]
  %v172 = vld [vmem:[%s1 + $0x1c0] sm:$0xf]
  %v173 = vld [vmem:[%s1 + $0x1c4] sm:$0xf]
  %v174 = vld [vmem:[%s1 + $0x1c8] sm:$0xf]
  %v175 = vld [vmem:[%s1 + $0x1cc] sm:$0xf]
  %v176 = vld [vmem:[%s1 + $0x1d0] sm:$0xf]
  %v177 = vld [vmem:[%s1 + $0x1d4] sm:$0xf]
  %v178 = vld [vmem:[%s1 + $0x1d8] sm:$0xf]
  %v179 = vld [vmem:[%s1 + $0x1dc] sm:$0xf]
  %v180 = vld [vmem:[%s1 + $0x1e0] sm:$0xf]
  %v181 = vld [vmem:[%s1 + $0x1e4] sm:$0xf]
  %v182 = vld [vmem:[%s1 + $0x1e8] sm:$0xf]
  %v183 = vld [vmem:[%s1 + $0x1ec] sm:$0xf]
  %v184 = vld [vmem:[%s1 + $0x1f0] sm:$0xf]
  %v185 = vld [vmem:[%s1 + $0x1f4] sm:$0xf]
  %v186 = vld [vmem:[%s1 + $0x1f8] sm:$0xf]
  %v187 = vld [vmem:[%s1 + $0x1fc] sm:$0xf]
  %v188 = vld [vmem:[%s2] sm:$0x1]
  %v190 = vperm.slane %v188, 0
  %v320 = vunpack.c.l.b16 %v60
  %v321 = vunpack.c.l.b16 %v61
  %v322 = vunpack.c.l.b16 %v62
  %v323 = vunpack.c.l.b16 %v63
  %v324 = vunpack.c.l.b16 %v64
  %v325 = vunpack.c.l.b16 %v65
  %v326 = vunpack.c.l.b16 %v66
  %v327 = vunpack.c.l.b16 %v67
  %v328 = vunpack.c.l.b16 %v68
  %v329 = vunpack.c.l.b16 %v69
  %v330 = vunpack.c.l.b16 %v70
  %v331 = vunpack.c.l.b16 %v71
  %v332 = vunpack.c.l.b16 %v72
  %v333 = vunpack.c.l.b16 %v73
  %v334 = vunpack.c.l.b16 %v74
  %v335 = vunpack.c.l.b16 %v75
  %v336 = vunpack.c.l.b16 %v76
  %v337 = vunpack.c.l.b16 %v77
  %v338 = vunpack.c.l.b16 %v78
  %v339 = vunpack.c.l.b16 %v79
  %v340 = vunpack.c.l.b16 %v80
  %v341 = vunpack.c.l.b16 %v81
  %v342 = vunpack.c.l.b16 %v82
  %v343 = vunpack.c.l.b16 %v83
  %v344 = vunpack.c.l.b16 %v84
  %v345 = vunpack.c.l.b16 %v85
  %v346 = vunpack.c.l.b16 %v86
  %v347 = vunpack.c.l.b16 %v87
  %v348 = vunpack.c.l.b16 %v88
  %v349 = vunpack.c.l.b16 %v89
  %v350 = vunpack.c.l.b16 %v90
  %v351 = vunpack.c.l.b16 %v91
  %v352 = vunpack.c.l.b16 %v92
  %v353 = vunpack.c.l.b16 %v93
  %v354 = vunpack.c.l.b16 %v94
  %v355 = vunpack.c.l.b16 %v95
  %v356 = vunpack.c.l.b16 %v96
  %v357 = vunpack.c.l.b16 %v97
  %v358 = vunpack.c.l.b16 %v98
  %v359 = vunpack.c.l.b16 %v99
  %v360 = vunpack.c.l.b16 %v100
  %v361 = vunpack.c.l.b16 %v101
  %v362 = vunpack.c.l.b16 %v102
  %v363 = vunpack.c.l.b16 %v103
  %v364 = vunpack.c.l.b16 %v104
  %v365 = vunpack.c.l.b16 %v105
  %v366 = vunpack.c.l.b16 %v106
  %v367 = vunpack.c.l.b16 %v107
  %v368 = vunpack.c.l.b16 %v108
  %v369 = vunpack.c.l.b16 %v109
  %v370 = vunpack.c.l.b16 %v110
  %v371 = vunpack.c.l.b16 %v111
  %v372 = vunpack.c.l.b16 %v112
  %v373 = vunpack.c.l.b16 %v113
  %v374 = vunpack.c.l.b16 %v114
  %v375 = vunpack.c.l.b16 %v115
  %v376 = vunpack.c.l.b16 %v116
  %v377 = vunpack.c.l.b16 %v117
  %v378 = vunpack.c.l.b16 %v118
  %v379 = vunpack.c.l.b16 %v119
  %v380 = vunpack.c.l.b16 %v120
  %v381 = vunpack.c.l.b16 %v121
  %v382 = vunpack.c.l.b16 %v122
  %v383 = vunpack.c.l.b16 %v123
  %v384 = vunpack.c.l.b16 %v124
  %v385 = vunpack.c.l.b16 %v125
  %v386 = vunpack.c.l.b16 %v126
  %v387 = vunpack.c.l.b16 %v127
  %v388 = vunpack.c.l.b16 %v128
  %v389 = vunpack.c.l.b16 %v129
  %v390 = vunpack.c.l.b16 %v130
  %v391 = vunpack.c.l.b16 %v131
  %v392 = vunpack.c.l.b16 %v132
  %v393 = vunpack.c.l.b16 %v133
  %v394 = vunpack.c.l.b16 %v134
  %v395 = vunpack.c.l.b16 %v135
  %v396 = vunpack.c.l.b16 %v136
  %v397 = vunpack.c.l.b16 %v137
  %v398 = vunpack.c.l.b16 %v138
  %v399 = vunpack.c.l.b16 %v139
  %v400 = vunpack.c.l.b16 %v140
  %v401 = vunpack.c.l.b16 %v141
  %v402 = vunpack.c.l.b16 %v142
  %v403 = vunpack.c.l.b16 %v143
  %v404 = vunpack.c.l.b16 %v144
  %v405 = vunpack.c.l.b16 %v145
  %v406 = vunpack.c.l.b16 %v146
  %v407 = vunpack.c.l.b16 %v147
  %v408 = vunpack.c.l.b16 %v148
  %v409 = vunpack.c.l.b16 %v149
  %v410 = vunpack.c.l.b16 %v150
  %v411 = vunpack.c.l.b16 %v151
  %v412 = vunpack.c.l.b16 %v152
  %v413 = vunpack.c.l.b16 %v153
  %v414 = vunpack.c.l.b16 %v154
  %v415 = vunpack.c.l.b16 %v155
  %v416 = vunpack.c.l.b16 %v156
  %v417 = vunpack.c.l.b16 %v157
  %v418 = vunpack.c.l.b16 %v158
  %v419 = vunpack.c.l.b16 %v159
  %v420 = vunpack.c.l.b16 %v160
  %v421 = vunpack.c.l.b16 %v161
  %v422 = vunpack.c.l.b16 %v162
  %v423 = vunpack.c.l.b16 %v163
  %v424 = vunpack.c.l.b16 %v164
  %v425 = vunpack.c.l.b16 %v165
  %v426 = vunpack.c.l.b16 %v166
  %v427 = vunpack.c.l.b16 %v167
  %v428 = vunpack.c.l.b16 %v168
  %v429 = vunpack.c.l.b16 %v169
  %v430 = vunpack.c.l.b16 %v170
  %v431 = vunpack.c.l.b16 %v171
  %v432 = vunpack.c.l.b16 %v172
  %v433 = vunpack.c.l.b16 %v173
  %v434 = vunpack.c.l.b16 %v174
  %v435 = vunpack.c.l.b16 %v175
  %v436 = vunpack.c.l.b16 %v176
  %v437 = vunpack.c.l.b16 %v177
  %v438 = vunpack.c.l.b16 %v178
  %v439 = vunpack.c.l.b16 %v179
  %v440 = vunpack.c.l.b16 %v180
  %v441 = vunpack.c.l.b16 %v181
  %v442 = vunpack.c.l.b16 %v182
  %v443 = vunpack.c.l.b16 %v183
  %v444 = vunpack.c.l.b16 %v184
  %v445 = vunpack.c.l.b16 %v185
  %v446 = vunpack.c.l.b16 %v186
  %v447 = vunpack.c.l.b16 %v187
  %v448 = vpack.c.b16 %v321, %v320
  %v449 = vpack.c.b16 %v323, %v322
  %v450 = vpack.c.b16 %v325, %v324
  %v451 = vpack.c.b16 %v327, %v326
  %v452 = vpack.c.b16 %v329, %v328
  %v453 = vpack.c.b16 %v331, %v330
  %v454 = vpack.c.b16 %v333, %v332
  %v455 = vpack.c.b16 %v335, %v334
  %v456 = vpack.c.b16 %v337, %v336
  %v457 = vpack.c.b16 %v339, %v338
  %v458 = vpack.c.b16 %v341, %v340
  %v459 = vpack.c.b16 %v343, %v342
  %v460 = vpack.c.b16 %v345, %v344
  %v461 = vpack.c.b16 %v347, %v346
  %v462 = vpack.c.b16 %v349, %v348
  %v463 = vpack.c.b16 %v351, %v350
  %v464 = vpack.c.b16 %v353, %v352
  %v465 = vpack.c.b16 %v355, %v354
  %v466 = vpack.c.b16 %v357, %v356
  %v467 = vpack.c.b16 %v359, %v358
  %v468 = vpack.c.b16 %v361, %v360
  %v469 = vpack.c.b16 %v363, %v362
  %v470 = vpack.c.b16 %v365, %v364
  %v471 = vpack.c.b16 %v367, %v366
  %v472 = vpack.c.b16 %v369, %v368
  %v473 = vpack.c.b16 %v371, %v370
  %v474 = vpack.c.b16 %v373, %v372
  %v475 = vpack.c.b16 %v375, %v374
  %v476 = vpack.c.b16 %v377, %v376
  %v477 = vpack.c.b16 %v379, %v378
  %v478 = vpack.c.b16 %v381, %v380
  %v479 = vpack.c.b16 %v383, %v382
  %v480 = vpack.c.b16 %v385, %v384
  %v481 = vpack.c.b16 %v387, %v386
  %v482 = vpack.c.b16 %v389, %v388
  %v483 = vpack.c.b16 %v391, %v390
  %v484 = vpack.c.b16 %v393, %v392
  %v485 = vpack.c.b16 %v395, %v394
  %v486 = vpack.c.b16 %v397, %v396
  %v487 = vpack.c.b16 %v399, %v398
  %v488 = vpack.c.b16 %v401, %v400
  %v489 = vpack.c.b16 %v403, %v402
  %v490 = vpack.c.b16 %v405, %v404
  %v491 = vpack.c.b16 %v407, %v406
  %v492 = vpack.c.b16 %v409, %v408
  %v493 = vpack.c.b16 %v411, %v410
  %v494 = vpack.c.b16 %v413, %v412
  %v495 = vpack.c.b16 %v415, %v414
  %v496 = vpack.c.b16 %v417, %v416
  %v497 = vpack.c.b16 %v419, %v418
  %v498 = vpack.c.b16 %v421, %v420
  %v499 = vpack.c.b16 %v423, %v422
  %v500 = vpack.c.b16 %v425, %v424
  %v501 = vpack.c.b16 %v427, %v426
  %v502 = vpack.c.b16 %v429, %v428
  %v503 = vpack.c.b16 %v431, %v430
  %v504 = vpack.c.b16 %v433, %v432
  %v505 = vpack.c.b16 %v435, %v434
  %v506 = vpack.c.b16 %v437, %v436
  %v507 = vpack.c.b16 %v439, %v438
  %v508 = vpack.c.b16 %v441, %v440
  %v509 = vpack.c.b16 %v443, %v442
  %v510 = vpack.c.b16 %v445, %v444
  %v511 = vpack.c.b16 %v447, %v446
  %576 = vmatpush.bf16.msra.mxu0 %v455
  %577 = vmatpush.bf16.msra.mxu0 %v454
  %578 = vmatpush.bf16.msra.mxu0 %v453
  %579 = vmatpush.bf16.msra.mxu0 %v452
  %580 = vmatpush.bf16.msra.mxu0 %v451
  %581 = vmatpush.bf16.msra.mxu0 %v450
  %582 = vmatpush.bf16.msra.mxu0 %v449
  %583 = vmatpush.bf16.msra.mxu0 %v448
  %584 = vmatmul.bf16.gmra.mxu0 %v52
  %v585 = vpop.f32.mrf.mxu0
  %v586 = vadd.f32 %v190, %v585
  %v587 = vpop.f32.mrf.mxu0
  %588 = vdwg.mxu0
  %589 = vmatpush.bf16.msra.mxu0 %v463
  %590 = vmatpush.bf16.msra.mxu0 %v462
  %591 = vmatpush.bf16.msra.mxu0 %v461
  %592 = vmatpush.bf16.msra.mxu0 %v460
  %593 = vmatpush.bf16.msra.mxu0 %v459
  %594 = vmatpush.bf16.msra.mxu0 %v458
  %595 = vmatpush.bf16.msra.mxu0 %v457
  %596 = vmatpush.bf16.msra.mxu0 %v456
  %597 = vmatmul.bf16.gmra.mxu0 %v53
  %v598 = vpop.f32.mrf.mxu0
  %v599 = vadd.f32 %v586, %v598
  %v600 = vpop.f32.mrf.mxu0
  %601 = vdwg.mxu0
  %602 = vmatpush.bf16.msra.mxu0 %v471
  %603 = vmatpush.bf16.msra.mxu0 %v470
  %604 = vmatpush.bf16.msra.mxu0 %v469
  %605 = vmatpush.bf16.msra.mxu0 %v468
  %606 = vmatpush.bf16.msra.mxu0 %v467
  %607 = vmatpush.bf16.msra.mxu0 %v466
  %608 = vmatpush.bf16.msra.mxu0 %v465
  %609 = vmatpush.bf16.msra.mxu0 %v464
  %610 = vmatmul.bf16.gmra.mxu0 %v54
  %v611 = vpop.f32.mrf.mxu0
  %v612 = vadd.f32 %v599, %v611
  %v613 = vpop.f32.mrf.mxu0
  %614 = vdwg.mxu0
  %615 = vmatpush.bf16.msra.mxu0 %v479
  %616 = vmatpush.bf16.msra.mxu0 %v478
  %617 = vmatpush.bf16.msra.mxu0 %v477
  %618 = vmatpush.bf16.msra.mxu0 %v476
  %619 = vmatpush.bf16.msra.mxu0 %v475
  %620 = vmatpush.bf16.msra.mxu0 %v474
  %621 = vmatpush.bf16.msra.mxu0 %v473
  %622 = vmatpush.bf16.msra.mxu0 %v472
  %623 = vmatmul.bf16.gmra.mxu0 %v55
  %v624 = vpop.f32.mrf.mxu0
  %v625 = vadd.f32 %v612, %v624
  %v626 = vpop.f32.mrf.mxu0
  %627 = vdwg.mxu0
  %628 = vmatpush.bf16.msra.mxu0 %v487
  %629 = vmatpush.bf16.msra.mxu0 %v486
  %630 = vmatpush.bf16.msra.mxu0 %v485
  %631 = vmatpush.bf16.msra.mxu0 %v484
  %632 = vmatpush.bf16.msra.mxu0 %v483
  %633 = vmatpush.bf16.msra.mxu0 %v482
  %634 = vmatpush.bf16.msra.mxu0 %v481
  %635 = vmatpush.bf16.msra.mxu0 %v480
  %636 = vmatmul.bf16.gmra.mxu0 %v56
  %v637 = vpop.f32.mrf.mxu0
  %v638 = vadd.f32 %v625, %v637
  %v639 = vpop.f32.mrf.mxu0
  %640 = vdwg.mxu0
  %641 = vmatpush.bf16.msra.mxu0 %v495
  %642 = vmatpush.bf16.msra.mxu0 %v494
  %643 = vmatpush.bf16.msra.mxu0 %v493
  %644 = vmatpush.bf16.msra.mxu0 %v492
  %645 = vmatpush.bf16.msra.mxu0 %v491
  %646 = vmatpush.bf16.msra.mxu0 %v490
  %647 = vmatpush.bf16.msra.mxu0 %v489
  %648 = vmatpush.bf16.msra.mxu0 %v488
  %649 = vmatmul.bf16.gmra.mxu0 %v57
  %v650 = vpop.f32.mrf.mxu0
  %v651 = vadd.f32 %v638, %v650
  %v652 = vpop.f32.mrf.mxu0
  %653 = vdwg.mxu0
  %654 = vmatpush.bf16.msra.mxu0 %v503
  %655 = vmatpush.bf16.msra.mxu0 %v502
  %656 = vmatpush.bf16.msra.mxu0 %v501
  %657 = vmatpush.bf16.msra.mxu0 %v500
  %658 = vmatpush.bf16.msra.mxu0 %v499
  %659 = vmatpush.bf16.msra.mxu0 %v498
  %660 = vmatpush.bf16.msra.mxu0 %v497
  %661 = vmatpush.bf16.msra.mxu0 %v496
  %662 = vmatmul.bf16.gmra.mxu0 %v58
  %v663 = vpop.f32.mrf.mxu0
  %v664 = vadd.f32 %v651, %v663
  %v665 = vpop.f32.mrf.mxu0
  %666 = vdwg.mxu0
  %667 = vmatpush.bf16.msra.mxu0 %v511
  %668 = vmatpush.bf16.msra.mxu0 %v510
  %669 = vmatpush.bf16.msra.mxu0 %v509
  %670 = vmatpush.bf16.msra.mxu0 %v508
  %671 = vmatpush.bf16.msra.mxu0 %v507
  %672 = vmatpush.bf16.msra.mxu0 %v506
  %673 = vmatpush.bf16.msra.mxu0 %v505
  %674 = vmatpush.bf16.msra.mxu0 %v504
  %675 = vmatmul.bf16.gmra.mxu0 %v59
  %v676 = vpop.f32.mrf.mxu0
  %v677 = vadd.f32 %v664, %v676
  %v678 = vpop.f32.mrf.mxu0
  %679 = vdwg.mxu0
  %vm680 = vcmp.gt.f32.partialorder %v677, 0.0
  %v681 = vmul.f32 %v677, 0.01
  %v682 = vsel %vm680, %v677, %v681
  %v683 = vld [vmem:[%s3] sm:$0x1]
  %v685 = vperm.slane %v683, 0
  %v687 = vmul.f32 %v682, %v685
  %vm688 = vcmask 1043456
  %v689 = vsel %vm688, %v687, 0.0
  %690 = vadd.xlane.f32.xlu0 %v689
  %v691 = vpop.xlane.xlu0 %690
  %s692 = sld [smem:[#allocation2]]
  %v693 = vstv %s692
  %v694 = vadd.f32 %v691, %v693
  %vm695 = vcmp.gt.f32.partialorder %v694, 0.0
  %v696 = vmul.f32 %v694, 0.01
  %v697 = vsel %vm695, %v694, %v696
  %vm698 = vcmask 3072
  %699 = vst.msk [vmem:[%s5] sm:$0xf] %vm698, %v697
  // Predicated region
  $region22: #{mine_forward.1} parent=0 // pred_check
    _
  $region23: #{mine_forward.1} parent=0 // pred_check_branch
    %701 = sbr.rel (0) target = $region25
  $region24: #{mine_forward.1} parent=0 // pred_region
    _
  $region25: #{mine_forward.1} parent=0 // pred_fallthru
    _
  // Predicated region
  $region26: #{mine_forward.1} parent=0 // pred_check
    _
  $region27: #{mine_forward.1} parent=0 // pred_check_branch
    %703 = sbr.rel (0) target = $region29
  $region28: #{mine_forward.1} parent=0 // pred_region
    _
  $region29: #{mine_forward.1} parent=0 // pred_fallthru
    _

</llo_original>
